<compile_context>
chip_gen: v5e
topology: v5e:2x2
jax: 0.10.0
libtpu: 0.0.40
codegen_flags: <defaults>
</compile_context>

<pallas_src>
import jax
import jax.numpy as jnp
from jax.experimental import pallas as pl
from jax.experimental.pallas import tpu as pltpu


def _round_up(x, m):
    return ((x + m - 1) // m) * m


def critic_kernel(s_ref, a_ref,
                  w14s_ref, w14a_ref, b14_ref,
                  w2_ref, b2_ref, w5_ref, b5_ref,
                  w3p_ref, w6p_ref, b36_ref,
                  q_ref):
    H = w2_ref.shape[0]

    # Activations cast to bf16 for the MXU; accumulate in f32.
    s = s_ref[...].astype(jnp.bfloat16)
    a = a_ref[...].astype(jnp.bfloat16)

    # --- Layer 1, both heads fused: (TB, in) @ (in, 2H) split into state/action parts ---
    hg = (jnp.dot(s, w14s_ref[...], preferred_element_type=jnp.float32)
          + jnp.dot(a, w14a_ref[...], preferred_element_type=jnp.float32)
          + b14_ref[...])
    hg = jnp.maximum(hg, 0.0)

    h = hg[:, :H].astype(jnp.bfloat16)   # Q1 head activations
    g = hg[:, H:].astype(jnp.bfloat16)   # Q2 head activations

    # --- Layer 2 (dominant HxH matmuls), per head ---
    h2 = jnp.maximum(
        jnp.dot(h, w2_ref[...], preferred_element_type=jnp.float32) + b2_ref[...], 0.0)
    g2 = jnp.maximum(
        jnp.dot(g, w5_ref[...], preferred_element_type=jnp.float32) + b5_ref[...], 0.0)

    # --- Layer 3: column-padded weights -> single (TB, 2) tile, no lane concat ---
    q = (jnp.dot(h2.astype(jnp.bfloat16), w3p_ref[...], preferred_element_type=jnp.float32)
         + jnp.dot(g2.astype(jnp.bfloat16), w6p_ref[...], preferred_element_type=jnp.float32)
         + b36_ref[...])
    q_ref[...] = q.astype(q_ref.dtype)


def pack_critic_params(params, state_dim):
    """Pre-pack raw (PyTorch-layout) params into the kernel layout (done once)."""
    (w1, b1, w2, b2, w3, b3, w4, b4, w5, b5, w6, b6) = params
    H = w2.shape[0]
    w14 = jnp.concatenate([w1, w4], axis=1)            # (in_dim, 2H) fused layer-1
    zeros_col = jnp.zeros((H, 1), jnp.float32)
    w3p = jnp.concatenate([w3, zeros_col], axis=1)     # (H, 2): [w3 | 0]
    w6p = jnp.concatenate([zeros_col, w6], axis=1)     # (H, 2): [0 | w6]
    return dict(
        w14_s=w14[:state_dim].astype(jnp.bfloat16),    # (state_dim, 2H)
        w14_a=w14[state_dim:].astype(jnp.bfloat16),    # (action_dim, 2H)
        b14=jnp.concatenate([b1, b4], axis=1),         # (1, 2H) f32
        w2=w2.astype(jnp.bfloat16), b2=b2,
        w5=w5.astype(jnp.bfloat16), b5=b5,
        w3p=w3p.astype(jnp.bfloat16), w6p=w6p.astype(jnp.bfloat16),
        b36=jnp.concatenate([b3, b6], axis=1),         # (1, 2) f32
    )


def critic_forward(state, action, packed, *, block_b=1024):
    """Twin-Q forward pass. Returns (q1, q2), each of shape (B, 1) float32.

    block_b: batch tile size. ~1024 is safe for v7x's 64 MiB VMEM; v5e/v6e can
    use larger values if desired.
    """
    B, state_dim = state.shape
    action_dim = action.shape[1]
    H = packed["w2"].shape[0]
    in_dim = state_dim + action_dim

    # Batch tile: multiple of 8 (sublane), capped by the (padded) batch.
    TB = min(int(block_b), _round_up(B, 8))
    TB = max(8, (TB // 8) * 8)
    B_pad = _round_up(B, TB)
    if B_pad != B:
        pad = B_pad - B
        state = jnp.pad(state, ((0, pad), (0, 0)))
        action = jnp.pad(action, ((0, pad), (0, 0)))

    grid = (B_pad // TB,)

    def batch_spec(feat):
        return pl.BlockSpec((TB, feat), lambda i: (i, 0))

    def resident(arr):
        # Same block index every step -> Pallas keeps it VMEM-resident (no re-DMA).
        return pl.BlockSpec(arr.shape, lambda i: (0, 0))

    flops = 2 * B_pad * (in_dim * 2 * H + 2 * H * H + 2 * H * 2)
    bytes_accessed = (
        B_pad * (in_dim + 2) * 4                        # f32 inputs + (B,2) output
        + (in_dim * 2 * H + 2 * H * H + 2 * H * 2) * 2  # bf16 weights
        + (2 * H + 2) * 4                               # f32 biases
    )

    q = pl.pallas_call(
        critic_kernel,
        out_shape=jax.ShapeDtypeStruct((B_pad, 2), jnp.float32),
        grid=grid,
        in_specs=[
            batch_spec(state_dim),
            batch_spec(action_dim),
            resident(packed["w14_s"]),
            resident(packed["w14_a"]),
            resident(packed["b14"]),
            resident(packed["w2"]),
            resident(packed["b2"]),
            resident(packed["w5"]),
            resident(packed["b5"]),
            resident(packed["w3p"]),
            resident(packed["w6p"]),
            resident(packed["b36"]),
        ],
        out_specs=pl.BlockSpec((TB, 2), lambda i: (i, 0)),
        compiler_params=pltpu.CompilerParams(
            dimension_semantics=("parallel",)),
        cost_estimate=pl.CostEstimate(
            flops=int(flops), transcendentals=0,
            bytes_accessed=int(bytes_accessed)),
    )(state, action,
      packed["w14_s"], packed["w14_a"], packed["b14"],
      packed["w2"], packed["b2"], packed["w5"], packed["b5"],
      packed["w3p"], packed["w6p"], packed["b36"])

    q1 = q[:B, 0:1]
    q2 = q[:B, 1:2]
    return q1, q2


def init_critic_params(key, state_dim, action_dim, hidden_dim=256):
    """Deterministic init mimicking nn.Linear's U(-1/sqrt(fan_in), 1/sqrt(fan_in)).

    Weights are stored as (in_features, out_features)."""
    in_dim = state_dim + action_dim

    def linear(key, fan_in, fan_out):
        kw, kb = jax.random.split(key)
        bound = 1.0 / jnp.sqrt(fan_in)
        w = jax.random.uniform(kw, (fan_in, fan_out), jnp.float32, -bound, bound)
        b = jax.random.uniform(kb, (1, fan_out), jnp.float32, -bound, bound)
        return w, b

    keys = jax.random.split(key, 6)
    w1, b1 = linear(keys[0], in_dim, hidden_dim)
    w2, b2 = linear(keys[1], hidden_dim, hidden_dim)
    w3, b3 = linear(keys[2], hidden_dim, 1)
    w4, b4 = linear(keys[3], in_dim, hidden_dim)
    w5, b5 = linear(keys[4], hidden_dim, hidden_dim)
    w6, b6 = linear(keys[5], hidden_dim, 1)
    return (w1, b1, w2, b2, w3, b3, w4, b4, w5, b5, w6, b6)


def critic_forward_ref(state, action, params, compute_dtype=jnp.float32):
    """Pure-JAX reference (mirrors the PyTorch forward). compute_dtype lets us
    mimic the kernel's bf16 MXU inputs with f32 accumulation."""
    (w1, b1, w2, b2, w3, b3, w4, b4, w5, b5, w6, b6) = params

    def dot(x, w):
        return jnp.dot(x.astype(compute_dtype), w.astype(compute_dtype),
                       preferred_element_type=jnp.float32)

    sa = jnp.concatenate([state, action], axis=1)
    h = jax.nn.relu(dot(sa, w1) + b1)
    h = jax.nn.relu(dot(h, w2) + b2)
    q1 = dot(h, w3) + b3
    g = jax.nn.relu(dot(sa, w4) + b4)
    g = jax.nn.relu(dot(g, w5) + b5)
    q2 = dot(g, w6) + b6
    return q1, q2


if __name__ == "__main__":
    # Small shapes consistent with the module. B=20 with block_b=8 exercises the
    # batch grid (3 steps) AND the remainder-padding path (20 -> 24 rows).
    B, STATE_DIM, ACTION_DIM, HIDDEN = 20, 12, 4, 128

    key = jax.random.PRNGKey(0)
    k_params, k_state, k_action = jax.random.split(key, 3)

    params = init_critic_params(k_params, STATE_DIM, ACTION_DIM, HIDDEN)
    packed = pack_critic_params(params, STATE_DIM)
    state = jax.random.normal(k_state, (B, STATE_DIM), dtype=jnp.float32)
    action = jax.random.normal(k_action, (B, ACTION_DIM), dtype=jnp.float32)

    q1, q2 = critic_forward(state, action, packed, block_b=8)
    jax.block_until_ready((q1, q2))
    assert q1.shape == (B, 1) and q2.shape == (B, 1)

    # Tight check against a reference that mimics the kernel's bf16-in / f32-acc math.
    q1_bf, q2_bf = critic_forward_ref(state, action, params, compute_dtype=jnp.bfloat16)
    assert jnp.allclose(q1, q1_bf, atol=1e-3, rtol=1e-3)
    assert jnp.allclose(q2, q2_bf, atol=1e-3, rtol=1e-3)

    # Loose sanity check against the full-f32 reference (bf16 MXU inputs lose mantissa).
    q1_ref, q2_ref = critic_forward_ref(state, action, params)
    assert jnp.allclose(q1, q1_ref, atol=1e-1, rtol=1e-1)
    assert jnp.allclose(q2, q2_ref, atol=1e-1, rtol=1e-1)

    print("KERNEL_OK")
</pallas_src>

<mosaic_0001>
module attributes {stable_mosaic.version = 11 : i64} {
  func.func @critic_kernel(%arg0: i32, %arg1: memref<8x12xf32, #tpu.memory_space<vmem>>, %arg2: memref<8x4xf32, #tpu.memory_space<vmem>>, %arg3: memref<12x256xbf16, #tpu.memory_space<vmem>>, %arg4: memref<4x256xbf16, #tpu.memory_space<vmem>>, %arg5: memref<1x256xf32, #tpu.memory_space<vmem>>, %arg6: memref<128x128xbf16, #tpu.memory_space<vmem>>, %arg7: memref<1x128xf32, #tpu.memory_space<vmem>>, %arg8: memref<128x128xbf16, #tpu.memory_space<vmem>>, %arg9: memref<1x128xf32, #tpu.memory_space<vmem>>, %arg10: memref<128x2xbf16, #tpu.memory_space<vmem>>, %arg11: memref<128x2xbf16, #tpu.memory_space<vmem>>, %arg12: memref<1x2xf32, #tpu.memory_space<vmem>>, %arg13: memref<8x2xf32, #tpu.memory_space<vmem>>) attributes {dimension_semantics = [#tpu.dimension_semantics<parallel>], iteration_bounds = array<i64: 3>, scalar_prefetch = 0 : i64, scratch_operands = 0 : i64, tpu.core_type = #tpu.core_type<tc>, window_params = [{transform_indices = @transform_0, window_bounds = array<i64: 8, 12>}, {transform_indices = @transform_1, window_bounds = array<i64: 8, 4>}, {pipeline_mode = #tpu.pipeline_mode<synchronous>, transform_indices = @transform_2, window_bounds = array<i64: 12, 256>}, {pipeline_mode = #tpu.pipeline_mode<synchronous>, transform_indices = @transform_3, window_bounds = array<i64: 4, 256>}, {pipeline_mode = #tpu.pipeline_mode<synchronous>, transform_indices = @transform_4, window_bounds = array<i64: 1, 256>}, {pipeline_mode = #tpu.pipeline_mode<synchronous>, transform_indices = @transform_5, window_bounds = array<i64: 128, 128>}, {pipeline_mode = #tpu.pipeline_mode<synchronous>, transform_indices = @transform_6, window_bounds = array<i64: 1, 128>}, {pipeline_mode = #tpu.pipeline_mode<synchronous>, transform_indices = @transform_7, window_bounds = array<i64: 128, 128>}, {pipeline_mode = #tpu.pipeline_mode<synchronous>, transform_indices = @transform_8, window_bounds = array<i64: 1, 128>}, {pipeline_mode = #tpu.pipeline_mode<synchronous>, transform_indices = @transform_9, window_bounds = array<i64: 128, 2>}, {pipeline_mode = #tpu.pipeline_mode<synchronous>, transform_indices = @transform_10, window_bounds = array<i64: 128, 2>}, {pipeline_mode = #tpu.pipeline_mode<synchronous>, transform_indices = @transform_11, window_bounds = array<i64: 1, 2>}, {transform_indices = @transform_12, window_bounds = array<i64: 8, 2>}]} {
    %c0 = arith.constant 0 : index
    %c0_0 = arith.constant 0 : index
    %0 = vector.load %arg1[%c0, %c0_0] : memref<8x12xf32, #tpu.memory_space<vmem>>, vector<8x12xf32>
    %1 = arith.truncf %0 : vector<8x12xf32> to vector<8x12xbf16>
    %c0_1 = arith.constant 0 : index
    %c0_2 = arith.constant 0 : index
    %2 = vector.load %arg2[%c0_1, %c0_2] : memref<8x4xf32, #tpu.memory_space<vmem>>, vector<8x4xf32>
    %3 = arith.truncf %2 : vector<8x4xf32> to vector<8x4xbf16>
    %c0_3 = arith.constant 0 : index
    %c0_4 = arith.constant 0 : index
    %4 = vector.load %arg3[%c0_3, %c0_4] : memref<12x256xbf16, #tpu.memory_space<vmem>>, vector<12x256xbf16>
    %cst = arith.constant dense<0.000000e+00> : vector<8x256xf32>
    %5 = tpu.matmul %1, %4, %cst {dimension_numbers = #tpu.dot_dimension_numbers<[1], [0], [0], [1], [0, 0, 1, 1], [], []>} : vector<8x12xbf16>, vector<12x256xbf16>, vector<8x256xf32> -> vector<8x256xf32>
    %c0_5 = arith.constant 0 : index
    %c0_6 = arith.constant 0 : index
    %6 = vector.load %arg4[%c0_5, %c0_6] : memref<4x256xbf16, #tpu.memory_space<vmem>>, vector<4x256xbf16>
    %cst_7 = arith.constant dense<0.000000e+00> : vector<8x256xf32>
    %7 = tpu.matmul %3, %6, %cst_7 {dimension_numbers = #tpu.dot_dimension_numbers<[1], [0], [0], [1], [0, 0, 1, 1], [], []>} : vector<8x4xbf16>, vector<4x256xbf16>, vector<8x256xf32> -> vector<8x256xf32>
    %8 = arith.addf %5, %7 : vector<8x256xf32>
    %c0_8 = arith.constant 0 : index
    %c0_9 = arith.constant 0 : index
    %9 = vector.load %arg5[%c0_8, %c0_9] : memref<1x256xf32, #tpu.memory_space<vmem>>, vector<1x256xf32>
    %10 = vector.broadcast %9 : vector<1x256xf32> to vector<8x256xf32>
    %11 = arith.addf %8, %10 : vector<8x256xf32>
    %cst_10 = arith.constant 0.000000e+00 : f32
    %12 = vector.broadcast %cst_10 : f32 to vector<8x256xf32>
    %13 = arith.maximumf %11, %12 : vector<8x256xf32>
    %14 = vector.extract_strided_slice %13 {offsets = [0, 0], sizes = [8, 128], strides = [1, 1]} : vector<8x256xf32> to vector<8x128xf32>
    %15 = arith.truncf %14 : vector<8x128xf32> to vector<8x128xbf16>
    %16 = vector.extract_strided_slice %13 {offsets = [0, 128], sizes = [8, 128], strides = [1, 1]} : vector<8x256xf32> to vector<8x128xf32>
    %17 = arith.truncf %16 : vector<8x128xf32> to vector<8x128xbf16>
    %c0_11 = arith.constant 0 : index
    %c0_12 = arith.constant 0 : index
    %18 = vector.load %arg6[%c0_11, %c0_12] : memref<128x128xbf16, #tpu.memory_space<vmem>>, vector<128x128xbf16>
    %cst_13 = arith.constant dense<0.000000e+00> : vector<8x128xf32>
    %19 = tpu.matmul %15, %18, %cst_13 {dimension_numbers = #tpu.dot_dimension_numbers<[1], [0], [0], [1], [0, 0, 1, 1], [], []>} : vector<8x128xbf16>, vector<128x128xbf16>, vector<8x128xf32> -> vector<8x128xf32>
    %c0_14 = arith.constant 0 : index
    %c0_15 = arith.constant 0 : index
    %20 = vector.load %arg7[%c0_14, %c0_15] : memref<1x128xf32, #tpu.memory_space<vmem>>, vector<1x128xf32>
    %21 = vector.broadcast %20 : vector<1x128xf32> to vector<8x128xf32>
    %22 = arith.addf %19, %21 : vector<8x128xf32>
    %cst_16 = arith.constant 0.000000e+00 : f32
    %23 = vector.broadcast %cst_16 : f32 to vector<8x128xf32>
    %24 = arith.maximumf %22, %23 : vector<8x128xf32>
    %c0_17 = arith.constant 0 : index
    %c0_18 = arith.constant 0 : index
    %25 = vector.load %arg8[%c0_17, %c0_18] : memref<128x128xbf16, #tpu.memory_space<vmem>>, vector<128x128xbf16>
    %cst_19 = arith.constant dense<0.000000e+00> : vector<8x128xf32>
    %26 = tpu.matmul %17, %25, %cst_19 {dimension_numbers = #tpu.dot_dimension_numbers<[1], [0], [0], [1], [0, 0, 1, 1], [], []>} : vector<8x128xbf16>, vector<128x128xbf16>, vector<8x128xf32> -> vector<8x128xf32>
    %c0_20 = arith.constant 0 : index
    %c0_21 = arith.constant 0 : index
    %27 = vector.load %arg9[%c0_20, %c0_21] : memref<1x128xf32, #tpu.memory_space<vmem>>, vector<1x128xf32>
    %28 = vector.broadcast %27 : vector<1x128xf32> to vector<8x128xf32>
    %29 = arith.addf %26, %28 : vector<8x128xf32>
    %cst_22 = arith.constant 0.000000e+00 : f32
    %30 = vector.broadcast %cst_22 : f32 to vector<8x128xf32>
    %31 = arith.maximumf %29, %30 : vector<8x128xf32>
    %32 = arith.truncf %24 : vector<8x128xf32> to vector<8x128xbf16>
    %c0_23 = arith.constant 0 : index
    %c0_24 = arith.constant 0 : index
    %33 = vector.load %arg10[%c0_23, %c0_24] : memref<128x2xbf16, #tpu.memory_space<vmem>>, vector<128x2xbf16>
    %cst_25 = arith.constant dense<0.000000e+00> : vector<8x2xf32>
    %34 = tpu.matmul %32, %33, %cst_25 {dimension_numbers = #tpu.dot_dimension_numbers<[1], [0], [0], [1], [0, 0, 1, 1], [], []>} : vector<8x128xbf16>, vector<128x2xbf16>, vector<8x2xf32> -> vector<8x2xf32>
    %35 = arith.truncf %31 : vector<8x128xf32> to vector<8x128xbf16>
    %c0_26 = arith.constant 0 : index
    %c0_27 = arith.constant 0 : index
    %36 = vector.load %arg11[%c0_26, %c0_27] : memref<128x2xbf16, #tpu.memory_space<vmem>>, vector<128x2xbf16>
    %cst_28 = arith.constant dense<0.000000e+00> : vector<8x2xf32>
    %37 = tpu.matmul %35, %36, %cst_28 {dimension_numbers = #tpu.dot_dimension_numbers<[1], [0], [0], [1], [0, 0, 1, 1], [], []>} : vector<8x128xbf16>, vector<128x2xbf16>, vector<8x2xf32> -> vector<8x2xf32>
    %38 = arith.addf %34, %37 : vector<8x2xf32>
    %c0_29 = arith.constant 0 : index
    %c0_30 = arith.constant 0 : index
    %39 = vector.load %arg12[%c0_29, %c0_30] : memref<1x2xf32, #tpu.memory_space<vmem>>, vector<1x2xf32>
    %40 = vector.broadcast %39 : vector<1x2xf32> to vector<8x2xf32>
    %41 = arith.addf %38, %40 : vector<8x2xf32>
    %c0_31 = arith.constant 0 : index
    %c0_32 = arith.constant 0 : index
    %42 = vector.load %arg13[%c0_31, %c0_32] : memref<8x2xf32, #tpu.memory_space<vmem>>, vector<8x2xf32>
    tpu.vector_store %arg13[%c0_31, %c0_32], %41 {strides = array<i32>} : memref<8x2xf32, #tpu.memory_space<vmem>>, vector<8x2xf32>,
    return
  }
  func.func @transform_0(%arg0: i32) -> (i32, i32) {
    %c0_i32 = arith.constant 0 : i32
    %c0_i32_0 = arith.constant 0 : i32
    return %arg0, %c0_i32 : i32, i32
  }
  func.func @transform_1(%arg0: i32) -> (i32, i32) {
    %c0_i32 = arith.constant 0 : i32
    %c0_i32_0 = arith.constant 0 : i32
    return %arg0, %c0_i32 : i32, i32
  }
  func.func @transform_2(%arg0: i32) -> (i32, i32) {
    %c0_i32 = arith.constant 0 : i32
    %c0_i32_0 = arith.constant 0 : i32
    %c0_i32_1 = arith.constant 0 : i32
    return %c0_i32, %c0_i32_0 : i32, i32
  }
  func.func @transform_3(%arg0: i32) -> (i32, i32) {
    %c0_i32 = arith.constant 0 : i32
    %c0_i32_0 = arith.constant 0 : i32
    %c0_i32_1 = arith.constant 0 : i32
    return %c0_i32, %c0_i32_0 : i32, i32
  }
  func.func @transform_4(%arg0: i32) -> (i32, i32) {
    %c0_i32 = arith.constant 0 : i32
    %c0_i32_0 = arith.constant 0 : i32
    %c0_i32_1 = arith.constant 0 : i32
    return %c0_i32, %c0_i32_0 : i32, i32
  }
  func.func @transform_5(%arg0: i32) -> (i32, i32) {
    %c0_i32 = arith.constant 0 : i32
    %c0_i32_0 = arith.constant 0 : i32
    %c0_i32_1 = arith.constant 0 : i32
    return %c0_i32, %c0_i32_0 : i32, i32
  }
  func.func @transform_6(%arg0: i32) -> (i32, i32) {
    %c0_i32 = arith.constant 0 : i32
    %c0_i32_0 = arith.constant 0 : i32
    %c0_i32_1 = arith.constant 0 : i32
    return %c0_i32, %c0_i32_0 : i32, i32
  }
  func.func @transform_7(%arg0: i32) -> (i32, i32) {
    %c0_i32 = arith.constant 0 : i32
    %c0_i32_0 = arith.constant 0 : i32
    %c0_i32_1 = arith.constant 0 : i32
    return %c0_i32, %c0_i32_0 : i32, i32
  }
  func.func @transform_8(%arg0: i32) -> (i32, i32) {
    %c0_i32 = arith.constant 0 : i32
    %c0_i32_0 = arith.constant 0 : i32
    %c0_i32_1 = arith.constant 0 : i32
    return %c0_i32, %c0_i32_0 : i32, i32
  }
  func.func @transform_9(%arg0: i32) -> (i32, i32) {
    %c0_i32 = arith.constant 0 : i32
    %c0_i32_0 = arith.constant 0 : i32
    %c0_i32_1 = arith.constant 0 : i32
    return %c0_i32, %c0_i32_0 : i32, i32
  }
  func.func @transform_10(%arg0: i32) -> (i32, i32) {
    %c0_i32 = arith.constant 0 : i32
    %c0_i32_0 = arith.constant 0 : i32
    %c0_i32_1 = arith.constant 0 : i32
    return %c0_i32, %c0_i32_0 : i32, i32
  }
  func.func @transform_11(%arg0: i32) -> (i32, i32) {
    %c0_i32 = arith.constant 0 : i32
    %c0_i32_0 = arith.constant 0 : i32
    %c0_i32_1 = arith.constant 0 : i32
    return %c0_i32, %c0_i32_0 : i32, i32
  }
  func.func @transform_12(%arg0: i32) -> (i32, i32) {
    %c0_i32 = arith.constant 0 : i32
    %c0_i32_0 = arith.constant 0 : i32
    return %arg0, %c0_i32 : i32, i32
  }
}

</mosaic_0001>

<llo_original>
// kernel: tpu_custom_call.1
$region0: #{tpu_custom_call.1}
  #allocation0 [shape = 'u32[]', space=smem, size = 0x4, offset = 0x4, fixed_abs, tag = 'smem constant byte address 0x4 - core index']
  #allocation1 [shape = 'u32[72,128]{1,0:T(1,128)}', space=vmem, size = 0x9000, scoped, tag = 'internal scratch']
  %s0 = inlined_call_operand.vmem [shape: f32[24,12], index: 0, kind: input, shape index: {}]
  %s1 = inlined_call_operand.vmem [shape: f32[24,4], index: 1, kind: input, shape index: {}]
  %s2 = inlined_call_operand.vmem [shape: bf16[12,256], index: 2, kind: input, shape index: {}]
  %s3 = inlined_call_operand.vmem [shape: bf16[4,256], index: 3, kind: input, shape index: {}]
  %s4 = inlined_call_operand.vmem [shape: f32[1,256], index: 4, kind: input, shape index: {}]
  %s5 = inlined_call_operand.vmem [shape: bf16[128,128], index: 5, kind: input, shape index: {}]
  %s6 = inlined_call_operand.vmem [shape: f32[1,128], index: 6, kind: input, shape index: {}]
  %s7 = inlined_call_operand.vmem [shape: bf16[128,128], index: 7, kind: input, shape index: {}]
  %s8 = inlined_call_operand.vmem [shape: f32[1,128], index: 8, kind: input, shape index: {}]
  %s9 = inlined_call_operand.vmem [shape: bf16[128,2], index: 9, kind: input, shape index: {}]
  %s10 = inlined_call_operand.vmem [shape: bf16[128,2], index: 10, kind: input, shape index: {}]
  %s11 = inlined_call_operand.vmem [shape: f32[1,2], index: 11, kind: input, shape index: {}]
  %s12 = inlined_call_operand.vmem [shape: f32[24,2], index: 12, kind: output, shape index: {}]
  %s13 = sld [smem:[#allocation0]]
  $region81: #{tpu_custom_call.1} parent=0
    _
  %s15 = ssub.s32 1, %s13
  %s16 = scalar_select 0, %s15, %s13
  loop: start=0, step=1, limit=5
  $region2: #{tpu_custom_call.1} parent=0 // loop_pre_header
    _
  $region3: #{tpu_custom_call.1} parent=0 // loop_header
    %s18 = sphi 0, %s22
    %p19 = scmp.ge.s32.totalorder %s18, 5
    %s28 = sphi 0, %s30
    %s31 = sphi 0, %s28
    %s32 = sphi 0, %s31
    %s48 = sphi 0, %s32
    %s54 = sphi 0, %s56
    %s57 = sphi 0, %s54
    %s58 = sphi 0, %s57
    %s74 = sphi 0, %s58
    %s78 = sphi 0, %s78
    %s80 = sphi 0, %s78
    %s81 = sphi 0, %s80
    %s95 = sphi 0, %s81
    %s99 = sphi 0, %s99
    %s101 = sphi 0, %s99
    %s102 = sphi 0, %s101
    %s116 = sphi 0, %s102
    %s120 = sphi 0, %s120
    %s122 = sphi 0, %s120
    %s123 = sphi 0, %s122
    %s137 = sphi 0, %s123
    %s141 = sphi 0, %s141
    %s143 = sphi 0, %s141
    %s144 = sphi 0, %s143
    %s158 = sphi 0, %s144
    %s162 = sphi 0, %s162
    %s164 = sphi 0, %s162
    %s165 = sphi 0, %s164
    %s179 = sphi 0, %s165
    %s183 = sphi 0, %s183
    %s185 = sphi 0, %s183
    %s186 = sphi 0, %s185
    %s200 = sphi 0, %s186
    %s204 = sphi 0, %s204
    %s206 = sphi 0, %s204
    %s207 = sphi 0, %s206
    %s221 = sphi 0, %s207
    %s225 = sphi 0, %s225
    %s227 = sphi 0, %s225
    %s228 = sphi 0, %s227
    %s242 = sphi 0, %s228
    %s246 = sphi 0, %s246
    %s248 = sphi 0, %s246
    %s249 = sphi 0, %s248
    %s263 = sphi 0, %s249
    %s267 = sphi 0, %s267
    %s269 = sphi 0, %s267
    %s270 = sphi 0, %s269
    %s284 = sphi 0, %s270
    %s290 = sphi 0, %s292
    %s293 = sphi 0, %s290
    %s294 = sphi 0, %s293
    %s310 = sphi 0, %s294
  $region4: #{tpu_custom_call.1} parent=0 // loop_header_branch
    %21 = sbr.rel (%p19) target = $region8
  $region5: #{tpu_custom_call.1} parent=0 // loop_body
    %s23 = ssub.s32 %s18, 1
    %s24 = ssub.s32 %s18, 2
    %s25 = sadd.s32 %s18, 1
    %s26 = ssub.s32 %s18, %s25
    %p27 = scmp.eq.s32.totalorder %s26, 0
    %s29 = sadd.s32 %s28, 1
    %s30 = scalar_select %p27, %s28, %s29
    %p33 = pneg %p27
    %p34 = scmp.eq.s32.totalorder %s18, 2
    %p35 = por %p33, %p34
    %p36 = scmp.ne.s32.totalorder %s28, %s31
    %p37 = scmp.eq.s32.totalorder %s18, 0
    %p38 = por %p36, %p37
    %p39 = scmp.ne.s32.totalorder %s28, %s31
    %p40 = scmp.eq.s32.totalorder %s23, 2
    %p41 = por %p39, %p40
    %p42 = scmp.ne.s32.totalorder %s31, %s32
    %p43 = scmp.eq.s32.totalorder %s23, 0
    %p44 = por %p42, %p43
    %p45 = scmp.ne.s32.totalorder %s31, %s32
    %p46 = scmp.eq.s32.totalorder %s24, 2
    %p47 = por %p45, %p46
    %p49 = scmp.ne.s32.totalorder %s32, %s48
    %p50 = scmp.eq.s32.totalorder %s24, 0
    %p51 = por %p49, %p50
    %s52 = ssub.s32 %s18, %s25
    %p53 = scmp.eq.s32.totalorder %s52, 0
    %s55 = sadd.s32 %s54, 1
    %s56 = scalar_select %p53, %s54, %s55
    %p59 = pneg %p53
    %p60 = scmp.eq.s32.totalorder %s18, 2
    %p61 = por %p59, %p60
    %p62 = scmp.ne.s32.totalorder %s54, %s57
    %p63 = scmp.eq.s32.totalorder %s18, 0
    %p64 = por %p62, %p63
    %p65 = scmp.ne.s32.totalorder %s54, %s57
    %p66 = scmp.eq.s32.totalorder %s23, 2
    %p67 = por %p65, %p66
    %p68 = scmp.ne.s32.totalorder %s57, %s58
    %p69 = scmp.eq.s32.totalorder %s23, 0
    %p70 = por %p68, %p69
    %p71 = scmp.ne.s32.totalorder %s57, %s58
    %p72 = scmp.eq.s32.totalorder %s24, 2
    %p73 = por %p71, %p72
    %p75 = scmp.ne.s32.totalorder %s58, %s74
    %p76 = scmp.eq.s32.totalorder %s24, 0
    %p77 = por %p75, %p76
    %s79 = sadd.s32 %s78, 1
    %p82 = scmp.eq.s32.totalorder %s18, 2
    %p83 = scmp.ne.s32.totalorder %s78, %s80
    %p84 = scmp.eq.s32.totalorder %s18, 0
    %p85 = por %p83, %p84
    %p86 = scmp.ne.s32.totalorder %s78, %s80
    %p87 = scmp.eq.s32.totalorder %s23, 2
    %p88 = por %p86, %p87
    %p89 = scmp.ne.s32.totalorder %s80, %s81
    %p90 = scmp.eq.s32.totalorder %s23, 0
    %p91 = por %p89, %p90
    %p92 = scmp.ne.s32.totalorder %s80, %s81
    %p93 = scmp.eq.s32.totalorder %s24, 2
    %p94 = por %p92, %p93
    %p96 = scmp.ne.s32.totalorder %s81, %s95
    %p97 = scmp.eq.s32.totalorder %s24, 0
    %p98 = por %p96, %p97
    %s100 = sadd.s32 %s99, 1
    %p103 = scmp.eq.s32.totalorder %s18, 2
    %p104 = scmp.ne.s32.totalorder %s99, %s101
    %p105 = scmp.eq.s32.totalorder %s18, 0
    %p106 = por %p104, %p105
    %p107 = scmp.ne.s32.totalorder %s99, %s101
    %p108 = scmp.eq.s32.totalorder %s23, 2
    %p109 = por %p107, %p108
    %p110 = scmp.ne.s32.totalorder %s101, %s102
    %p111 = scmp.eq.s32.totalorder %s23, 0
    %p112 = por %p110, %p111
    %p113 = scmp.ne.s32.totalorder %s101, %s102
    %p114 = scmp.eq.s32.totalorder %s24, 2
    %p115 = por %p113, %p114
    %p117 = scmp.ne.s32.totalorder %s102, %s116
    %p118 = scmp.eq.s32.totalorder %s24, 0
    %p119 = por %p117, %p118
    %s121 = sadd.s32 %s120, 1
    %p124 = scmp.eq.s32.totalorder %s18, 2
    %p125 = scmp.ne.s32.totalorder %s120, %s122
    %p126 = scmp.eq.s32.totalorder %s18, 0
    %p127 = por %p125, %p126
    %p128 = scmp.ne.s32.totalorder %s120, %s122
    %p129 = scmp.eq.s32.totalorder %s23, 2
    %p130 = por %p128, %p129
    %p131 = scmp.ne.s32.totalorder %s122, %s123
    %p132 = scmp.eq.s32.totalorder %s23, 0
    %p133 = por %p131, %p132
    %p134 = scmp.ne.s32.totalorder %s122, %s123
    %p135 = scmp.eq.s32.totalorder %s24, 2
    %p136 = por %p134, %p135
    %p138 = scmp.ne.s32.totalorder %s123, %s137
    %p139 = scmp.eq.s32.totalorder %s24, 0
    %p140 = por %p138, %p139
    %s142 = sadd.s32 %s141, 1
    %p145 = scmp.eq.s32.totalorder %s18, 2
    %p146 = scmp.ne.s32.totalorder %s141, %s143
    %p147 = scmp.eq.s32.totalorder %s18, 0
    %p148 = por %p146, %p147
    %p149 = scmp.ne.s32.totalorder %s141, %s143
    %p150 = scmp.eq.s32.totalorder %s23, 2
    %p151 = por %p149, %p150
    %p152 = scmp.ne.s32.totalorder %s143, %s144
    %p153 = scmp.eq.s32.totalorder %s23, 0
    %p154 = por %p152, %p153
    %p155 = scmp.ne.s32.totalorder %s143, %s144
    %p156 = scmp.eq.s32.totalorder %s24, 2
    %p157 = por %p155, %p156
    %p159 = scmp.ne.s32.totalorder %s144, %s158
    %p160 = scmp.eq.s32.totalorder %s24, 0
    %p161 = por %p159, %p160
    %s163 = sadd.s32 %s162, 1
    %p166 = scmp.eq.s32.totalorder %s18, 2
    %p167 = scmp.ne.s32.totalorder %s162, %s164
    %p168 = scmp.eq.s32.totalorder %s18, 0
    %p169 = por %p167, %p168
    %p170 = scmp.ne.s32.totalorder %s162, %s164
    %p171 = scmp.eq.s32.totalorder %s23, 2
    %p172 = por %p170, %p171
    %p173 = scmp.ne.s32.totalorder %s164, %s165
    %p174 = scmp.eq.s32.totalorder %s23, 0
    %p175 = por %p173, %p174
    %p176 = scmp.ne.s32.totalorder %s164, %s165
    %p177 = scmp.eq.s32.totalorder %s24, 2
    %p178 = por %p176, %p177
    %p180 = scmp.ne.s32.totalorder %s165, %s179
    %p181 = scmp.eq.s32.totalorder %s24, 0
    %p182 = por %p180, %p181
    %s184 = sadd.s32 %s183, 1
    %p187 = scmp.eq.s32.totalorder %s18, 2
    %p188 = scmp.ne.s32.totalorder %s183, %s185
    %p189 = scmp.eq.s32.totalorder %s18, 0
    %p190 = por %p188, %p189
    %p191 = scmp.ne.s32.totalorder %s183, %s185
    %p192 = scmp.eq.s32.totalorder %s23, 2
    %p193 = por %p191, %p192
    %p194 = scmp.ne.s32.totalorder %s185, %s186
    %p195 = scmp.eq.s32.totalorder %s23, 0
    %p196 = por %p194, %p195
    %p197 = scmp.ne.s32.totalorder %s185, %s186
    %p198 = scmp.eq.s32.totalorder %s24, 2
    %p199 = por %p197, %p198
    %p201 = scmp.ne.s32.totalorder %s186, %s200
    %p202 = scmp.eq.s32.totalorder %s24, 0
    %p203 = por %p201, %p202
    %s205 = sadd.s32 %s204, 1
    %p208 = scmp.eq.s32.totalorder %s18, 2
    %p209 = scmp.ne.s32.totalorder %s204, %s206
    %p210 = scmp.eq.s32.totalorder %s18, 0
    %p211 = por %p209, %p210
    %p212 = scmp.ne.s32.totalorder %s204, %s206
    %p213 = scmp.eq.s32.totalorder %s23, 2
    %p214 = por %p212, %p213
    %p215 = scmp.ne.s32.totalorder %s206, %s207
    %p216 = scmp.eq.s32.totalorder %s23, 0
    %p217 = por %p215, %p216
    %p218 = scmp.ne.s32.totalorder %s206, %s207
    %p219 = scmp.eq.s32.totalorder %s24, 2
    %p220 = por %p218, %p219
    %p222 = scmp.ne.s32.totalorder %s207, %s221
    %p223 = scmp.eq.s32.totalorder %s24, 0
    %p224 = por %p222, %p223
    %s226 = sadd.s32 %s225, 1
    %p229 = scmp.eq.s32.totalorder %s18, 2
    %p230 = scmp.ne.s32.totalorder %s225, %s227
    %p231 = scmp.eq.s32.totalorder %s18, 0
    %p232 = por %p230, %p231
    %p233 = scmp.ne.s32.totalorder %s225, %s227
    %p234 = scmp.eq.s32.totalorder %s23, 2
    %p235 = por %p233, %p234
    %p236 = scmp.ne.s32.totalorder %s227, %s228
    %p237 = scmp.eq.s32.totalorder %s23, 0
    %p238 = por %p236, %p237
    %p239 = scmp.ne.s32.totalorder %s227, %s228
    %p240 = scmp.eq.s32.totalorder %s24, 2
    %p241 = por %p239, %p240
    %p243 = scmp.ne.s32.totalorder %s228, %s242
    %p244 = scmp.eq.s32.totalorder %s24, 0
    %p245 = por %p243, %p244
    %s247 = sadd.s32 %s246, 1
    %p250 = scmp.eq.s32.totalorder %s18, 2
    %p251 = scmp.ne.s32.totalorder %s246, %s248
    %p252 = scmp.eq.s32.totalorder %s18, 0
    %p253 = por %p251, %p252
    %p254 = scmp.ne.s32.totalorder %s246, %s248
    %p255 = scmp.eq.s32.totalorder %s23, 2
    %p256 = por %p254, %p255
    %p257 = scmp.ne.s32.totalorder %s248, %s249
    %p258 = scmp.eq.s32.totalorder %s23, 0
    %p259 = por %p257, %p258
    %p260 = scmp.ne.s32.totalorder %s248, %s249
    %p261 = scmp.eq.s32.totalorder %s24, 2
    %p262 = por %p260, %p261
    %p264 = scmp.ne.s32.totalorder %s249, %s263
    %p265 = scmp.eq.s32.totalorder %s24, 0
    %p266 = por %p264, %p265
    %s268 = sadd.s32 %s267, 1
    %p271 = scmp.eq.s32.totalorder %s18, 2
    %p272 = scmp.ne.s32.totalorder %s267, %s269
    %p273 = scmp.eq.s32.totalorder %s18, 0
    %p274 = por %p272, %p273
    %p275 = scmp.ne.s32.totalorder %s267, %s269
    %p276 = scmp.eq.s32.totalorder %s23, 2
    %p277 = por %p275, %p276
    %p278 = scmp.ne.s32.totalorder %s269, %s270
    %p279 = scmp.eq.s32.totalorder %s23, 0
    %p280 = por %p278, %p279
    %p281 = scmp.ne.s32.totalorder %s269, %s270
    %p282 = scmp.eq.s32.totalorder %s24, 2
    %p283 = por %p281, %p282
    %p285 = scmp.ne.s32.totalorder %s270, %s284
    %p286 = scmp.eq.s32.totalorder %s24, 0
    %p287 = por %p285, %p286
    %s288 = ssub.s32 %s18, %s25
    %p289 = scmp.eq.s32.totalorder %s288, 0
    %s291 = sadd.s32 %s290, 1
    %s292 = scalar_select %p289, %s290, %s291
    %p295 = pneg %p289
    %p296 = scmp.eq.s32.totalorder %s18, 2
    %p297 = por %p295, %p296
    %p298 = scmp.ne.s32.totalorder %s290, %s293
    %p299 = scmp.eq.s32.totalorder %s18, 0
    %p300 = por %p298, %p299
    %p301 = scmp.ne.s32.totalorder %s290, %s293
    %p302 = scmp.eq.s32.totalorder %s23, 2
    %p303 = por %p301, %p302
    %p304 = scmp.ne.s32.totalorder %s293, %s294
    %p305 = scmp.eq.s32.totalorder %s23, 0
    %p306 = por %p304, %p305
    %p307 = scmp.ne.s32.totalorder %s293, %s294
    %p308 = scmp.eq.s32.totalorder %s24, 2
    %p309 = por %p307, %p308
    %p311 = scmp.ne.s32.totalorder %s294, %s310
    %p312 = scmp.eq.s32.totalorder %s24, 0
    %p313 = por %p311, %p312
    %p314 = scmp.le.s32.totalorder 1, %s18
    %p315 = scmp.lt.s32.totalorder %s18, 4
    %p316 = pnand %p314, %p315
    %p317 = pneg %p316
    // Predicated region
    $region9: #{tpu_custom_call.1} parent=5 // pred_check
      _
    $region10: #{tpu_custom_call.1} parent=5 // pred_check_branch
      %319 = sbr.rel (%p316) target = $region12
    $region11: #{tpu_custom_call.1} parent=5 // pred_region
      %s320 = ssub.s32 %s18, 1
      // Predicated region
      $region13: #{tpu_custom_call.1} parent=11 // pred_check
        %p321 = pneg %p91
      $region14: #{tpu_custom_call.1} parent=11 // pred_check_branch
        %323 = sbr.rel (%p321) target = $region16
      $region15: #{tpu_custom_call.1} parent=11 // pred_region
        _
      $region16: #{tpu_custom_call.1} parent=11 // pred_fallthru
        _
      // Predicated region
      $region17: #{tpu_custom_call.1} parent=11 // pred_check
        %p324 = pneg %p112
      $region18: #{tpu_custom_call.1} parent=11 // pred_check_branch
        %326 = sbr.rel (%p324) target = $region20
      $region19: #{tpu_custom_call.1} parent=11 // pred_region
        _
      $region20: #{tpu_custom_call.1} parent=11 // pred_fallthru
        _
      // Predicated region
      $region21: #{tpu_custom_call.1} parent=11 // pred_check
        %p327 = pneg %p133
      $region22: #{tpu_custom_call.1} parent=11 // pred_check_branch
        %329 = sbr.rel (%p327) target = $region24
      $region23: #{tpu_custom_call.1} parent=11 // pred_region
        _
      $region24: #{tpu_custom_call.1} parent=11 // pred_fallthru
        _
      // Predicated region
      $region25: #{tpu_custom_call.1} parent=11 // pred_check
        %p330 = pneg %p154
      $region26: #{tpu_custom_call.1} parent=11 // pred_check_branch
        %332 = sbr.rel (%p330) target = $region28
      $region27: #{tpu_custom_call.1} parent=11 // pred_region
        _
      $region28: #{tpu_custom_call.1} parent=11 // pred_fallthru
        _
      // Predicated region
      $region29: #{tpu_custom_call.1} parent=11 // pred_check
        %p333 = pneg %p175
      $region30: #{tpu_custom_call.1} parent=11 // pred_check_branch
        %335 = sbr.rel (%p333) target = $region32
      $region31: #{tpu_custom_call.1} parent=11 // pred_region
        _
      $region32: #{tpu_custom_call.1} parent=11 // pred_fallthru
        _
      // Predicated region
      $region33: #{tpu_custom_call.1} parent=11 // pred_check
        %p336 = pneg %p196
      $region34: #{tpu_custom_call.1} parent=11 // pred_check_branch
        %338 = sbr.rel (%p336) target = $region36
      $region35: #{tpu_custom_call.1} parent=11 // pred_region
        _
      $region36: #{tpu_custom_call.1} parent=11 // pred_fallthru
        _
      // Predicated region
      $region37: #{tpu_custom_call.1} parent=11 // pred_check
        %p339 = pneg %p217
      $region38: #{tpu_custom_call.1} parent=11 // pred_check_branch
        %341 = sbr.rel (%p339) target = $region40
      $region39: #{tpu_custom_call.1} parent=11 // pred_region
        _
      $region40: #{tpu_custom_call.1} parent=11 // pred_fallthru
        _
      // Predicated region
      $region41: #{tpu_custom_call.1} parent=11 // pred_check
        %p342 = pneg %p238
      $region42: #{tpu_custom_call.1} parent=11 // pred_check_branch
        %344 = sbr.rel (%p342) target = $region44
      $region43: #{tpu_custom_call.1} parent=11 // pred_region
        _
      $region44: #{tpu_custom_call.1} parent=11 // pred_fallthru
        _
      // Predicated region
      $region45: #{tpu_custom_call.1} parent=11 // pred_check
        %p345 = pneg %p259
      $region46: #{tpu_custom_call.1} parent=11 // pred_check_branch
        %347 = sbr.rel (%p345) target = $region48
      $region47: #{tpu_custom_call.1} parent=11 // pred_region
        _
      $region48: #{tpu_custom_call.1} parent=11 // pred_fallthru
        _
      // Predicated region
      $region49: #{tpu_custom_call.1} parent=11 // pred_check
        %p348 = pneg %p280
      $region50: #{tpu_custom_call.1} parent=11 // pred_check_branch
        %350 = sbr.rel (%p348) target = $region52
      $region51: #{tpu_custom_call.1} parent=11 // pred_region
        _
      $region52: #{tpu_custom_call.1} parent=11 // pred_fallthru
        _
    $region12: #{tpu_custom_call.1} parent=5 // pred_fallthru
      _
    %p351 = scmp.lt.s32.totalorder %s18, 3
    // Predicated region
    $region53: #{tpu_custom_call.1} parent=5 // pred_check
      %p352 = pneg %p351
    $region54: #{tpu_custom_call.1} parent=5 // pred_check_branch
      %354 = sbr.rel (%p352) target = $region56
    $region55: #{tpu_custom_call.1} parent=5 // pred_region
      // Predicated region
      $region57: #{tpu_custom_call.1} parent=55 // pred_check
        %p355 = pneg %p38
      $region58: #{tpu_custom_call.1} parent=55 // pred_check_branch
        %357 = sbr.rel (%p355) target = $region60
      $region59: #{tpu_custom_call.1} parent=55 // pred_region
        %p358 = scmp.lt.s32.totalorder %s18, 2
        %s359 = scalar_select %p358, %s18, 2
        %s360 = smul.addr %s359, 8
        %s361 = scalar_lea.vmem %s0, %s360
      $region60: #{tpu_custom_call.1} parent=55 // pred_fallthru
        _
      // Predicated region
      $region61: #{tpu_custom_call.1} parent=55 // pred_check
        %p362 = pneg %p64
      $region62: #{tpu_custom_call.1} parent=55 // pred_check_branch
        %364 = sbr.rel (%p362) target = $region64
      $region63: #{tpu_custom_call.1} parent=55 // pred_region
        %p365 = scmp.lt.s32.totalorder %s18, 2
        %s366 = scalar_select %p365, %s18, 2
        %s367 = smul.addr %s366, 8
        %s368 = scalar_lea.vmem %s1, %s367
      $region64: #{tpu_custom_call.1} parent=55 // pred_fallthru
        _
    $region56: #{tpu_custom_call.1} parent=5 // pred_fallthru
      _
    %p369 = scmp.le.s32.totalorder 1, %s18
    %p370 = scmp.lt.s32.totalorder %s18, 4
    %p371 = pnand %p369, %p370
    %p372 = pneg %p371
    // Predicated region
    $region65: #{tpu_custom_call.1} parent=5 // pred_check
      _
    $region66: #{tpu_custom_call.1} parent=5 // pred_check_branch
      %374 = sbr.rel (%p371) target = $region68
    $region67: #{tpu_custom_call.1} parent=5 // pred_region
      %s375 = ssub.s32 %s18, 1
      %p376 = scmp.lt.s32.totalorder %s23, 2
      %s377 = scalar_select %p376, %s23, 2
      %s378 = smul.addr %s377, 8
      %s379 = scalar_lea.vmem %s0, %s378
      %p380 = pneg %p44
      %p381 = pneg %p41
      %p382 = scmp.lt.s32.totalorder %s23, 2
      %s383 = scalar_select %p382, %s23, 2
      %s384 = smul.addr %s383, 8
      %s385 = scalar_lea.vmem %s1, %s384
      %p386 = pneg %p70
      %p387 = pneg %p67
      %p388 = pneg %p91
      %p389 = pneg %p88
      %p390 = pneg %p112
      %p391 = pneg %p109
      %p392 = pneg %p133
      %p393 = pneg %p130
      %p394 = pneg %p154
      %p395 = pneg %p151
      %p396 = pneg %p175
      %p397 = pneg %p172
      %p398 = pneg %p196
      %p399 = pneg %p193
      %p400 = pneg %p217
      %p401 = pneg %p214
      %p402 = pneg %p238
      %p403 = pneg %p235
      %p404 = pneg %p259
      %p405 = pneg %p256
      %p406 = pneg %p280
      %p407 = pneg %p277
      %p408 = pneg %p306
      %p409 = pneg %p303
      %p410 = scmp.lt.s32.totalorder %s23, 2
      %s411 = scalar_select %p410, %s23, 2
      %s412 = smul.addr %s411, 8
      %s413 = scalar_lea.vmem %s12, %s412
      %p414 = scmp.lt.s32.totalorder %s23, 2
      %s415 = scalar_select %p414, %s23, 2
      %s416 = smul.addr %s415, 8
      %s417 = scalar_lea.vmem %s0, %s416
      %p418 = scmp.lt.s32.totalorder %s23, 2
      %s419 = scalar_select %p418, %s23, 2
      %s420 = smul.addr %s419, 8
      %s421 = scalar_lea.vmem %s1, %s420
      %p422 = scmp.lt.s32.totalorder %s23, 2
      %s423 = scalar_select %p422, %s23, 2
      %s424 = smul.addr %s423, 8
      %s425 = scalar_lea.vmem %s12, %s424
      %v427 = vld [vmem:[%s417] sm:$0xff]
      %v428 = vpack.c.bf16 %v427, %v427
      %v429 = vld [vmem:[%s421] sm:$0xff]
      %v430 = vpack.c.bf16 %v429, %v429
      %v431 = vld [vmem:[%s2] sm:$0xff]
      %v432 = vld [vmem:[%s2 + $0x8] sm:$0x33]
      %v433 = vld [vmem:[%s3] sm:$0xf]
      %435 = vst [vmem:[#allocation1] ss:$4 sm:$0xff] %v433
      %v436 = vld.sshfl [vmem:[#allocation1] sm:$0xff pattern:$0x73625140]
      %v437 = vld.sshfl [vmem:[#allocation1 + $0x8] sm:$0xff pattern:$0x73625140]
      %vm438 = vcmask 31744
      %v440 = vsel %vm438, %v430, 0
      %vm442 = vcmask 1041408
      %v443 = vsel %vm442, %v436, 0
      %v445 = vsel %vm442, %v437, 0
      %447 = vmatpush.bf16.msra.mxu0 0
      %448 = vmatpush.bf16.msra.mxu0 0
      %449 = vmatpush.bf16.msra.mxu0 0
      %450 = vmatpush.bf16.msra.mxu0 0
      %451 = vmatpush.bf16.msra.mxu0 0
      %452 = vmatpush.bf16.msra.mxu0 0
      %453 = vmatpush.bf16.msra.mxu0 0
      %454 = vmatpush.bf16.msra.mxu0 %v443
      %455 = vmatmul.bf16.gmra.mxu0 %v440
      %v456 = vpop.f32.mrf.mxu0
      %v457 = vadd.f32 0.0, %v456
      %v458 = vpop.f32.mrf.mxu0
      %459 = vdwg.mxu0
      %460 = vmatpush.bf16.msra.mxu0 0
      %461 = vmatpush.bf16.msra.mxu0 0
      %462 = vmatpush.bf16.msra.mxu0 0
      %463 = vmatpush.bf16.msra.mxu0 0
      %464 = vmatpush.bf16.msra.mxu0 0
      %465 = vmatpush.bf16.msra.mxu0 0
      %466 = vmatpush.bf16.msra.mxu0 0
      %467 = vmatpush.bf16.msra.mxu0 %v445
      %468 = vmatmul.bf16.gmra.mxu0 %v440
      %v469 = vpop.f32.mrf.mxu0
      %v470 = vadd.f32 0.0, %v469
      %v471 = vpop.f32.mrf.mxu0
      %472 = vdwg.mxu0
      %v475 = vunpack.c.l.b16 %v431
      %v476 = vunpack.c.h.b16 %v431
      %v477 = vunpack.c.l.b16 %v432
      %v478 = vunpack.c.h.b16 %v432
      %v479 = vpack.c.b16 %v477, %v475
      %v480 = vpack.c.b16 %v478, %v476
      %vm481 = vcmask 97280
      %v483 = vsel %vm481, %v428, 0
      %vm485 = vcmask 1045504
      %v487 = vsel %vm485, %v479, 0
      %v490 = vsel %vm485, %v480, 0
      %492 = vmatpush.bf16.msra.mxu0 0
      %493 = vmatpush.bf16.msra.mxu0 0
      %494 = vmatpush.bf16.msra.mxu0 0
      %495 = vmatpush.bf16.msra.mxu0 0
      %496 = vmatpush.bf16.msra.mxu0 0
      %497 = vmatpush.bf16.msra.mxu0 0
      %498 = vmatpush.bf16.msra.mxu0 0
      %499 = vmatpush.bf16.msra.mxu0 %v487
      %500 = vmatmul.bf16.gmra.mxu0 %v483
      %v501 = vpop.f32.mrf.mxu0
      %v502 = vadd.f32 %v457, %v501
      %v503 = vpop.f32.mrf.mxu0
      %504 = vdwg.mxu0
      %505 = vmatpush.bf16.msra.mxu0 0
      %506 = vmatpush.bf16.msra.mxu0 0
      %507 = vmatpush.bf16.msra.mxu0 0
      %508 = vmatpush.bf16.msra.mxu0 0
      %509 = vmatpush.bf16.msra.mxu0 0
      %510 = vmatpush.bf16.msra.mxu0 0
      %511 = vmatpush.bf16.msra.mxu0 0
      %512 = vmatpush.bf16.msra.mxu0 %v490
      %513 = vmatmul.bf16.gmra.mxu0 %v483
      %v514 = vpop.f32.mrf.mxu0
      %v515 = vadd.f32 %v470, %v514
      %v516 = vpop.f32.mrf.mxu0
      %517 = vdwg.mxu0
      %v518 = vld [vmem:[%s4] sm:$0x3]
      %v520 = vperm.slane %v518, 0
      %v521 = vperm.slane %v518, 1
      %v524 = vadd.f32 %v502, %v520
      %v525 = vadd.f32 %v515, %v521
      %v526 = vmax.f32 %v524, 0.0
      %v527 = vmax.f32 %v525, 0.0
      %v528 = vpack.c.bf16 %v526, %v526
      %v529 = vpack.c.bf16 %v527, %v527
      %v530 = vld [vmem:[%s5] sm:$0xf]
      %v531 = vld [vmem:[%s5 + $0x4] sm:$0xf]
      %v532 = vld [vmem:[%s5 + $0x8] sm:$0xf]
      %v533 = vld [vmem:[%s5 + $0xc] sm:$0xf]
      %v534 = vld [vmem:[%s5 + $0x10] sm:$0xf]
      %v535 = vld [vmem:[%s5 + $0x14] sm:$0xf]
      %v536 = vld [vmem:[%s5 + $0x18] sm:$0xf]
      %v537 = vld [vmem:[%s5 + $0x1c] sm:$0xf]
      %v538 = vld [vmem:[%s5 + $0x20] sm:$0xf]
      %v539 = vld [vmem:[%s5 + $0x24] sm:$0xf]
      %v540 = vld [vmem:[%s5 + $0x28] sm:$0xf]
      %v541 = vld [vmem:[%s5 + $0x2c] sm:$0xf]
      %v542 = vld [vmem:[%s5 + $0x30] sm:$0xf]
      %v543 = vld [vmem:[%s5 + $0x34] sm:$0xf]
      %v544 = vld [vmem:[%s5 + $0x38] sm:$0xf]
      %v545 = vld [vmem:[%s5 + $0x3c] sm:$0xf]
      %v546 = vld [vmem:[%s6] sm:$0x1]
      %v548 = vperm.slane %v546, 0
      %v566 = vunpack.c.l.b16 %v530
      %v567 = vunpack.c.l.b16 %v531
      %v568 = vunpack.c.l.b16 %v532
      %v569 = vunpack.c.l.b16 %v533
      %v570 = vunpack.c.l.b16 %v534
      %v571 = vunpack.c.l.b16 %v535
      %v572 = vunpack.c.l.b16 %v536
      %v573 = vunpack.c.l.b16 %v537
      %v574 = vunpack.c.l.b16 %v538
      %v575 = vunpack.c.l.b16 %v539
      %v576 = vunpack.c.l.b16 %v540
      %v577 = vunpack.c.l.b16 %v541
      %v578 = vunpack.c.l.b16 %v542
      %v579 = vunpack.c.l.b16 %v543
      %v580 = vunpack.c.l.b16 %v544
      %v581 = vunpack.c.l.b16 %v545
      %v582 = vpack.c.b16 %v567, %v566
      %v583 = vpack.c.b16 %v569, %v568
      %v584 = vpack.c.b16 %v571, %v570
      %v585 = vpack.c.b16 %v573, %v572
      %v586 = vpack.c.b16 %v575, %v574
      %v587 = vpack.c.b16 %v577, %v576
      %v588 = vpack.c.b16 %v579, %v578
      %v589 = vpack.c.b16 %v581, %v580
      %598 = vmatpush.bf16.msra.mxu0 %v589
      %599 = vmatpush.bf16.msra.mxu0 %v588
      %600 = vmatpush.bf16.msra.mxu0 %v587
      %601 = vmatpush.bf16.msra.mxu0 %v586
      %602 = vmatpush.bf16.msra.mxu0 %v585
      %603 = vmatpush.bf16.msra.mxu0 %v584
      %604 = vmatpush.bf16.msra.mxu0 %v583
      %605 = vmatpush.bf16.msra.mxu0 %v582
      %606 = vmatmul.bf16.gmra.mxu0 %v528
      %v607 = vpop.f32.mrf.mxu0
      %v608 = vadd.f32 %v548, %v607
      %v609 = vpop.f32.mrf.mxu0
      %610 = vdwg.mxu0
      %v611 = vmax.f32 %v608, 0.0
      %v612 = vld [vmem:[%s7] sm:$0xf]
      %v613 = vld [vmem:[%s7 + $0x4] sm:$0xf]
      %v614 = vld [vmem:[%s7 + $0x8] sm:$0xf]
      %v615 = vld [vmem:[%s7 + $0xc] sm:$0xf]
      %v616 = vld [vmem:[%s7 + $0x10] sm:$0xf]
      %v617 = vld [vmem:[%s7 + $0x14] sm:$0xf]
      %v618 = vld [vmem:[%s7 + $0x18] sm:$0xf]
      %v619 = vld [vmem:[%s7 + $0x1c] sm:$0xf]
      %v620 = vld [vmem:[%s7 + $0x20] sm:$0xf]
      %v621 = vld [vmem:[%s7 + $0x24] sm:$0xf]
      %v622 = vld [vmem:[%s7 + $0x28] sm:$0xf]
      %v623 = vld [vmem:[%s7 + $0x2c] sm:$0xf]
      %v624 = vld [vmem:[%s7 + $0x30] sm:$0xf]
      %v625 = vld [vmem:[%s7 + $0x34] sm:$0xf]
      %v626 = vld [vmem:[%s7 + $0x38] sm:$0xf]
      %v627 = vld [vmem:[%s7 + $0x3c] sm:$0xf]
      %v628 = vld [vmem:[%s8] sm:$0x1]
      %v630 = vperm.slane %v628, 0
      %v648 = vunpack.c.l.b16 %v612
      %v649 = vunpack.c.l.b16 %v613
      %v650 = vunpack.c.l.b16 %v614
      %v651 = vunpack.c.l.b16 %v615
      %v652 = vunpack.c.l.b16 %v616
      %v653 = vunpack.c.l.b16 %v617
      %v654 = vunpack.c.l.b16 %v618
      %v655 = vunpack.c.l.b16 %v619
      %v656 = vunpack.c.l.b16 %v620
      %v657 = vunpack.c.l.b16 %v621
      %v658 = vunpack.c.l.b16 %v622
      %v659 = vunpack.c.l.b16 %v623
      %v660 = vunpack.c.l.b16 %v624
      %v661 = vunpack.c.l.b16 %v625
      %v662 = vunpack.c.l.b16 %v626
      %v663 = vunpack.c.l.b16 %v627
      %v664 = vpack.c.b16 %v649, %v648
      %v665 = vpack.c.b16 %v651, %v650
      %v666 = vpack.c.b16 %v653, %v652
      %v667 = vpack.c.b16 %v655, %v654
      %v668 = vpack.c.b16 %v657, %v656
      %v669 = vpack.c.b16 %v659, %v658
      %v670 = vpack.c.b16 %v661, %v660
      %v671 = vpack.c.b16 %v663, %v662
      %680 = vmatpush.bf16.msra.mxu0 %v671
      %681 = vmatpush.bf16.msra.mxu0 %v670
      %682 = vmatpush.bf16.msra.mxu0 %v669
      %683 = vmatpush.bf16.msra.mxu0 %v668
      %684 = vmatpush.bf16.msra.mxu0 %v667
      %685 = vmatpush.bf16.msra.mxu0 %v666
      %686 = vmatpush.bf16.msra.mxu0 %v665
      %687 = vmatpush.bf16.msra.mxu0 %v664
      %688 = vmatmul.bf16.gmra.mxu0 %v529
      %v689 = vpop.f32.mrf.mxu0
      %v690 = vadd.f32 %v630, %v689
      %v691 = vpop.f32.mrf.mxu0
      %692 = vdwg.mxu0
      %v693 = vmax.f32 %v690, 0.0
      %v694 = vpack.c.bf16 %v611, %v611
      %v695 = vld [vmem:[%s9] sm:$0xf]
      %v696 = vld [vmem:[%s9 + $0x4] sm:$0xf]
      %v697 = vld [vmem:[%s9 + $0x8] sm:$0xf]
      %v698 = vld [vmem:[%s9 + $0xc] sm:$0xf]
      %v699 = vld [vmem:[%s9 + $0x10] sm:$0xf]
      %v700 = vld [vmem:[%s9 + $0x14] sm:$0xf]
      %v701 = vld [vmem:[%s9 + $0x18] sm:$0xf]
      %v702 = vld [vmem:[%s9 + $0x1c] sm:$0xf]
      %v703 = vld [vmem:[%s9 + $0x20] sm:$0xf]
      %v704 = vld [vmem:[%s9 + $0x24] sm:$0xf]
      %v705 = vld [vmem:[%s9 + $0x28] sm:$0xf]
      %v706 = vld [vmem:[%s9 + $0x2c] sm:$0xf]
      %v707 = vld [vmem:[%s9 + $0x30] sm:$0xf]
      %v708 = vld [vmem:[%s9 + $0x34] sm:$0xf]
      %v709 = vld [vmem:[%s9 + $0x38] sm:$0xf]
      %v710 = vld [vmem:[%s9 + $0x3c] sm:$0xf]
      %v711 = vpack.c.bf16 %v693, %v693
      %v712 = vld [vmem:[%s10] sm:$0xf]
      %v713 = vld [vmem:[%s10 + $0x4] sm:$0xf]
      %v714 = vld [vmem:[%s10 + $0x8] sm:$0xf]
      %v715 = vld [vmem:[%s10 + $0xc] sm:$0xf]
      %v716 = vld [vmem:[%s10 + $0x10] sm:$0xf]
      %v717 = vld [vmem:[%s10 + $0x14] sm:$0xf]
      %v718 = vld [vmem:[%s10 + $0x18] sm:$0xf]
      %v719 = vld [vmem:[%s10 + $0x1c] sm:$0xf]
      %v720 = vld [vmem:[%s10 + $0x20] sm:$0xf]
      %v721 = vld [vmem:[%s10 + $0x24] sm:$0xf]
      %v722 = vld [vmem:[%s10 + $0x28] sm:$0xf]
      %v723 = vld [vmem:[%s10 + $0x2c] sm:$0xf]
      %v724 = vld [vmem:[%s10 + $0x30] sm:$0xf]
      %v725 = vld [vmem:[%s10 + $0x34] sm:$0xf]
      %v726 = vld [vmem:[%s10 + $0x38] sm:$0xf]
      %v727 = vld [vmem:[%s10 + $0x3c] sm:$0xf]
      %v744 = vunpack.c.l.b16 %v712
      %v745 = vunpack.c.l.b16 %v713
      %v746 = vunpack.c.l.b16 %v714
      %v747 = vunpack.c.l.b16 %v715
      %v748 = vunpack.c.l.b16 %v716
      %v749 = vunpack.c.l.b16 %v717
      %v750 = vunpack.c.l.b16 %v718
      %v751 = vunpack.c.l.b16 %v719
      %v752 = vunpack.c.l.b16 %v720
      %v753 = vunpack.c.l.b16 %v721
      %v754 = vunpack.c.l.b16 %v722
      %v755 = vunpack.c.l.b16 %v723
      %v756 = vunpack.c.l.b16 %v724
      %v757 = vunpack.c.l.b16 %v725
      %v758 = vunpack.c.l.b16 %v726
      %v759 = vunpack.c.l.b16 %v727
      %v760 = vpack.c.b16 %v745, %v744
      %v761 = vpack.c.b16 %v747, %v746
      %v762 = vpack.c.b16 %v749, %v748
      %v763 = vpack.c.b16 %v751, %v750
      %v764 = vpack.c.b16 %v753, %v752
      %v765 = vpack.c.b16 %v755, %v754
      %v766 = vpack.c.b16 %v757, %v756
      %v767 = vpack.c.b16 %v759, %v758
      %776 = vmatpush.bf16.msra.mxu0 %v767
      %777 = vmatpush.bf16.msra.mxu0 %v766
      %778 = vmatpush.bf16.msra.mxu0 %v765
      %779 = vmatpush.bf16.msra.mxu0 %v764
      %780 = vmatpush.bf16.msra.mxu0 %v763
      %781 = vmatpush.bf16.msra.mxu0 %v762
      %782 = vmatpush.bf16.msra.mxu0 %v761
      %783 = vmatpush.bf16.msra.mxu0 %v760
      %784 = vmatmul.bf16.gmra.mxu0 %v711
      %v785 = vpop.f32.mrf.mxu0
      %v786 = vadd.f32 0.0, %v785
      %v787 = vpop.f32.mrf.mxu0
      %788 = vdwg.mxu0
      %v805 = vunpack.c.l.b16 %v695
      %v806 = vunpack.c.l.b16 %v696
      %v807 = vunpack.c.l.b16 %v697
      %v808 = vunpack.c.l.b16 %v698
      %v809 = vunpack.c.l.b16 %v699
      %v810 = vunpack.c.l.b16 %v700
      %v811 = vunpack.c.l.b16 %v701
      %v812 = vunpack.c.l.b16 %v702
      %v813 = vunpack.c.l.b16 %v703
      %v814 = vunpack.c.l.b16 %v704
      %v815 = vunpack.c.l.b16 %v705
      %v816 = vunpack.c.l.b16 %v706
      %v817 = vunpack.c.l.b16 %v707
      %v818 = vunpack.c.l.b16 %v708
      %v819 = vunpack.c.l.b16 %v709
      %v820 = vunpack.c.l.b16 %v710
      %v821 = vpack.c.b16 %v806, %v805
      %v822 = vpack.c.b16 %v808, %v807
      %v823 = vpack.c.b16 %v810, %v809
      %v824 = vpack.c.b16 %v812, %v811
      %v825 = vpack.c.b16 %v814, %v813
      %v826 = vpack.c.b16 %v816, %v815
      %v827 = vpack.c.b16 %v818, %v817
      %v828 = vpack.c.b16 %v820, %v819
      %837 = vmatpush.bf16.msra.mxu0 %v828
      %838 = vmatpush.bf16.msra.mxu0 %v827
      %839 = vmatpush.bf16.msra.mxu0 %v826
      %840 = vmatpush.bf16.msra.mxu0 %v825
      %841 = vmatpush.bf16.msra.mxu0 %v824
      %842 = vmatpush.bf16.msra.mxu0 %v823
      %843 = vmatpush.bf16.msra.mxu0 %v822
      %844 = vmatpush.bf16.msra.mxu0 %v821
      %845 = vmatmul.bf16.gmra.mxu0 %v694
      %v846 = vpop.f32.mrf.mxu0
      %v847 = vadd.f32 %v786, %v846
      %v848 = vpop.f32.mrf.mxu0
      %849 = vdwg.mxu0
      %v850 = vld [vmem:[%s11] sm:$0x1]
      %v852 = vperm.slane %v850, 0
      %v854 = vadd.f32 %v847, %v852
      %vm855 = vcmask 15360
      %856 = vst.msk [vmem:[%s425] sm:$0xff] %vm855, %v854
      %p857 = scmp.lt.s32.totalorder %s23, 2
      %s858 = scalar_select %p857, %s23, 2
      %s859 = smul.addr %s858, 8
      %s860 = scalar_lea.vmem %s12, %s859
      // Predicated region
      $region69: #{tpu_custom_call.1} parent=67 // pred_check
        %p861 = pneg %p303
      $region70: #{tpu_custom_call.1} parent=67 // pred_check_branch
        %863 = sbr.rel (%p861) target = $region72
      $region71: #{tpu_custom_call.1} parent=67 // pred_region
        _
      $region72: #{tpu_custom_call.1} parent=67 // pred_fallthru
        _
    $region68: #{tpu_custom_call.1} parent=5 // pred_fallthru
      _
    %p864 = scmp.le.s32.totalorder 2, %s18
    // Predicated region
    $region73: #{tpu_custom_call.1} parent=5 // pred_check
      %p865 = pneg %p864
    $region74: #{tpu_custom_call.1} parent=5 // pred_check_branch
      %867 = sbr.rel (%p865) target = $region76
    $region75: #{tpu_custom_call.1} parent=5 // pred_region
      %s868 = ssub.s32 %s18, 2
      // Predicated region
      $region77: #{tpu_custom_call.1} parent=75 // pred_check
        %p869 = pneg %p309
      $region78: #{tpu_custom_call.1} parent=75 // pred_check_branch
        %871 = sbr.rel (%p869) target = $region80
      $region79: #{tpu_custom_call.1} parent=75 // pred_region
        %p872 = scmp.lt.s32.totalorder %s24, 2
        %s873 = scalar_select %p872, %s24, 2
        %s874 = smul.addr %s873, 8
        %s875 = scalar_lea.vmem %s12, %s874
      $region80: #{tpu_custom_call.1} parent=75 // pred_fallthru
        _
    $region76: #{tpu_custom_call.1} parent=5 // pred_fallthru
      _
  $region6: #{tpu_custom_call.1} parent=0 // loop_footer
    %s22 = sadd.s32 1, %s18
  $region7: #{tpu_custom_call.1} parent=0 // loop_footer_branch
    %17 = sbr.rel target = $region3
  $region8: #{tpu_custom_call.1} parent=0 // loop_exit
    _

</llo_original>
